<compile_context>
chip_gen: v7x
topology: tpu7x:2x2x1
jax: 0.10.0
libtpu: 0.0.40
codegen_flags: <defaults>
</compile_context>

<pallas_src>
import functools
import math

import jax
import jax.numpy as jnp
from jax.experimental import pallas as pl
from jax.experimental.pallas import tpu as pltpu

_LOG2E = 1.4426950408889634
_NEG_BIG = -1e30  # finite "masked" value; avoids (-inf) - (-inf) = NaN traps


def _round_up(x, m):
    return ((x + m - 1) // m) * m


def _default_tile_cap():
    """256 on 256-wide-MXU chips (v6e/v7x), 128 on v5e and older."""
    try:
        kind = jax.devices()[0].device_kind.lower()
    except Exception:
        return 128
    if any(v in kind for v in ("v2", "v3", "v4", "v5")):
        return 128
    return 256


def _flash_attn_kernel(q_ref, k_ref, v_ref, wo_ref, bo_ref, o_ref,
                       m_scr, l_scr, acc_scr, *, heads, lk_valid, tk):
    """Grid point = (batch n, q-tile qi, kv-tile ki). kv axis is the reduction.

    q_ref: (1, H, tq, D) bf16, pre-projected and pre-scaled by log2(e)/sqrt(E)
    k_ref/v_ref: (1, H, tk, D) bf16, pre-projected
    wo_ref: (H, D, E) bf16, bo_ref: (1, E) f32
    """
    ki = pl.program_id(2)
    nk = pl.num_programs(2)

    @pl.when(ki == 0)
    def _init():
        m_scr[...] = jnp.full(m_scr.shape, _NEG_BIG, m_scr.dtype)
        l_scr[...] = jnp.zeros(l_scr.shape, l_scr.dtype)
        acc_scr[...] = jnp.zeros(acc_scr.shape, acc_scr.dtype)

    q_blk = q_ref[0]                                   # (H, tq, D) bf16
    k_blk = k_ref[0]                                   # (H, tk, D) bf16
    v_blk = v_ref[0]                                   # (H, tk, D) bf16

    # QK^T for all heads at once (batched over heads, contract last dims; no
    # explicit transpose of K). Result in f32. Scale & log2e already in Q.
    s = jax.lax.dot_general(
        q_blk, k_blk,
        dimension_numbers=(((2,), (2,)), ((0,), (0,))),
        preferred_element_type=jnp.float32)            # (H, tq, tk)

    if lk_valid % tk != 0:                             # static: key padding exists
        k_idx = ki * tk + jax.lax.broadcasted_iota(jnp.int32, (1, 1, tk), 2)
        mask_bias = jnp.where(k_idx < lk_valid, 0.0, _NEG_BIG).astype(jnp.float32)
        s = s + mask_bias                              # additive finite mask

    # Online softmax in base-2 (exp2 with log2e folded into Q), all f32.
    m_prev = m_scr[...]                                # (H, tq, 1)
    m_new = jnp.maximum(m_prev, jnp.max(s, axis=-1, keepdims=True))
    alpha = jnp.exp2(m_prev - m_new)
    p = jnp.exp2(s - m_new)                            # (H, tq, tk) f32
    l_scr[...] = alpha * l_scr[...] + jnp.sum(p, axis=-1, keepdims=True)
    pv = jax.lax.dot_general(
        p.astype(jnp.bfloat16), v_blk,
        dimension_numbers=(((2,), (1,)), ((0,), (0,))),
        preferred_element_type=jnp.float32)            # (H, tq, D)
    acc_scr[...] = alpha * acc_scr[...] + pv
    m_scr[...] = m_new
    # TODO(synk): attention_dropout is identity in eval mode; training mode
    # would draw a mask here via pltpu.prng_seed / pltpu.prng_random_bits.

    @pl.when(ki == nk - 1)
    def _finalize():
        # fc_out: the concat over heads is expressed as a sum of per-head
        # (tq, D) @ (D, E) matmuls -- no concatenate / relayout needed.
        inv_l = pl.reciprocal(l_scr[...], approx=True)         # (H, tq, 1)
        o_all = (acc_scr[...] * inv_l).astype(jnp.bfloat16)    # (H, tq, D)
        out = None
        for h in range(heads):                                 # static unroll
            c = jnp.dot(o_all[h], wo_ref[h], preferred_element_type=jnp.float32)
            out = c if out is None else out + c
        out = out + bo_ref[...]                                # (tq, E) + (1, E)
        # TODO(synk): output_dropout is identity in eval mode.
        o_ref[0] = out.astype(o_ref.dtype)


def prepare_params(params, heads):
    """One-time weight packing (bf16 casts / per-head fc_out reshape).

    Done outside the hot path so per-call weight traffic is just the reads the
    matmuls themselves need.
    """
    E = params["wq"].shape[0]
    assert E % heads == 0
    D = E // heads
    return {
        "wq": params["wq"].astype(jnp.bfloat16),
        "wk": params["wk"].astype(jnp.bfloat16),
        "wv": params["wv"].astype(jnp.bfloat16),
        "bq": params["bq"].astype(jnp.float32),
        "bk": params["bk"].astype(jnp.float32),
        "bv": params["bv"].astype(jnp.float32),
        "wo": params["wo"].reshape(heads, D, E).astype(jnp.bfloat16),
        "bo": params["bo"].reshape(1, E).astype(jnp.float32),
    }


@functools.partial(jax.jit,
                   static_argnames=("heads", "q_tile", "kv_tile", "out_dtype"))
def attention_with_dropout(query, key, value, packed, *, heads,
                           q_tile=None, kv_tile=None, out_dtype=None):
    """query/key/value: (N, L, E) float32. packed: output of prepare_params."""
    N, Lq, E = query.shape
    Lk = key.shape[1]
    assert E % heads == 0
    D = E // heads
    out_dtype = out_dtype or query.dtype

    # Tile sizes: multiples of 8 sublanes, capped per chip generation.
    cap = _default_tile_cap()
    tq = min(_round_up(Lq, 8), q_tile or cap)
    tk = min(_round_up(Lk, 8), kv_tile or cap)
    Lq_p = _round_up(Lq, tq)
    Lk_p = _round_up(Lk, tk)

    # ---- Projections hoisted out of the kernel (one batched matmul each) ----
    # NOTE: module scales by 1/sqrt(embed_size), not 1/sqrt(head_dim); fold the
    # softmax exp2 factor log2(e) into the same scale.
    q_scale = jnp.float32(_LOG2E / math.sqrt(E))

    def proj(x, w, b):
        return jnp.dot(x.astype(jnp.bfloat16), w,
                       preferred_element_type=jnp.float32) + b

    q_p = proj(query, packed["wq"], packed["bq"]) * q_scale
    k_p = proj(key, packed["wk"], packed["bk"])
    v_p = proj(value, packed["wv"], packed["bv"])

    def to_heads(x, L, Lp):
        x = x.astype(jnp.bfloat16).reshape(N, L, heads, D).transpose(0, 2, 1, 3)
        pad = Lp - L
        if pad:
            x = jnp.pad(x, ((0, 0), (0, 0), (0, pad), (0, 0)))
        return x                                       # (N, H, Lp, D)

    q_h = to_heads(q_p, Lq, Lq_p)
    k_h = to_heads(k_p, Lk, Lk_p)
    v_h = to_heads(v_p, Lk, Lk_p)

    grid = (N, Lq_p // tq, Lk_p // tk)
    kernel = functools.partial(_flash_attn_kernel, heads=heads,
                               lk_valid=Lk, tk=tk)

    out = pl.pallas_call(
        kernel,
        out_shape=jax.ShapeDtypeStruct((N, Lq_p, E), out_dtype),
        grid_spec=pltpu.PrefetchScalarGridSpec(
            num_scalar_prefetch=0,
            grid=grid,
            in_specs=[
                pl.BlockSpec((1, heads, tq, D), lambda n, qi, ki: (n, 0, qi, 0)),
                pl.BlockSpec((1, heads, tk, D), lambda n, qi, ki: (n, 0, ki, 0)),
                pl.BlockSpec((1, heads, tk, D), lambda n, qi, ki: (n, 0, ki, 0)),
                pl.BlockSpec((heads, D, E), lambda n, qi, ki: (0, 0, 0)),  # Wo
                pl.BlockSpec((1, E), lambda n, qi, ki: (0, 0)),            # bo
            ],
            out_specs=pl.BlockSpec((1, tq, E), lambda n, qi, ki: (n, qi, 0)),
            scratch_shapes=[
                pltpu.VMEM((heads, tq, 1), jnp.float32),  # running max m
                pltpu.VMEM((heads, tq, 1), jnp.float32),  # running sum l
                pltpu.VMEM((heads, tq, D), jnp.float32),  # PV accumulator
            ],
        ),
        compiler_params=pltpu.CompilerParams(
            dimension_semantics=("parallel", "parallel", "arbitrary"),
            vmem_limit_bytes=48 * 1024 * 1024,
        ),
    )(q_h, k_h, v_h, packed["wo"], packed["bo"])

    return out[:, :Lq, :]


def _reference(query, key, value, params, heads):
    """Pure-JAX f32 reference mirroring the PyTorch forward (eval mode)."""
    N, Lq, E = query.shape
    Lk = key.shape[1]
    D = E // heads
    lin = lambda x, w, b: x @ w + b
    Q = lin(query, params["wq"], params["bq"]).reshape(N, Lq, heads, D).transpose(0, 2, 1, 3)
    K = lin(key, params["wk"], params["bk"]).reshape(N, Lk, heads, D).transpose(0, 2, 1, 3)
    V = lin(value, params["wv"], params["bv"]).reshape(N, Lk, heads, D).transpose(0, 2, 1, 3)
    energy = jnp.einsum("nhqd,nhkd->nhqk", Q, K) / math.sqrt(E)
    attn = jax.nn.softmax(energy, axis=-1)
    out = jnp.einsum("nhqk,nhkd->nhqd", attn, V)
    out = out.transpose(0, 2, 1, 3).reshape(N, Lq, E)
    return lin(out, params["wo"], params["bo"])


if __name__ == "__main__":
    # Small, module-consistent shapes.
    N, L, E, H = 2, 8, 32, 4

    key0 = jax.random.PRNGKey(0)
    keys = jax.random.split(key0, 11)

    # Deterministic parameter init (torch.nn.Linear-like uniform bound).
    bound = 1.0 / math.sqrt(E)
    uni = lambda k, shape: jax.random.uniform(k, shape, jnp.float32, -bound, bound)
    params = {
        "wq": uni(keys[0], (E, E)), "bq": uni(keys[1], (E,)),
        "wk": uni(keys[2], (E, E)), "bk": uni(keys[3], (E,)),
        "wv": uni(keys[4], (E, E)), "bv": uni(keys[5], (E,)),
        "wo": uni(keys[6], (E, E)), "bo": uni(keys[7], (E,)),
    }

    query = jax.random.normal(keys[8], (N, L, E), jnp.float32)
    key_ = jax.random.normal(keys[9], (N, L, E), jnp.float32)
    value = jax.random.normal(keys[10], (N, L, E), jnp.float32)

    packed = prepare_params(params, H)   # one-time weight packing
    out = attention_with_dropout(query, key_, value, packed, heads=H)
    out = jax.block_until_ready(out)

    ref = _reference(query, key_, value, params, H)
    assert out.shape == (N, L, E)
    # bf16 MXU operands + approximate EUP reciprocal => relaxed tolerance vs the
    # pure-f32 reference.
    assert jnp.allclose(out, ref, atol=5e-2, rtol=5e-2), "mismatch vs reference"

    print("KERNEL_OK")
</pallas_src>

<mosaic_0001>
module attributes {stable_mosaic.version = 11 : i64} {
  func.func @_flash_attn_kernel(%arg0: i32, %arg1: i32, %arg2: i32, %arg3: memref<1x4x8x8xbf16, #tpu.memory_space<vmem>>, %arg4: memref<1x4x8x8xbf16, #tpu.memory_space<vmem>>, %arg5: memref<1x4x8x8xbf16, #tpu.memory_space<vmem>>, %arg6: memref<4x8x32xbf16, #tpu.memory_space<vmem>>, %arg7: memref<1x32xf32, #tpu.memory_space<vmem>>, %arg8: memref<1x8x32xf32, #tpu.memory_space<vmem>>, %arg9: memref<4x8x1xf32, #tpu.memory_space<vmem>>, %arg10: memref<4x8x1xf32, #tpu.memory_space<vmem>>, %arg11: memref<4x8x8xf32, #tpu.memory_space<vmem>>) attributes {dimension_semantics = [#tpu.dimension_semantics<parallel>, #tpu.dimension_semantics<parallel>, #tpu.dimension_semantics<arbitrary>], iteration_bounds = array<i64: 2, 1, 1>, scalar_prefetch = 0 : i64, scratch_operands = 3 : i64, tpu.core_type = #tpu.core_type<tc>, window_params = [{transform_indices = @transform_0, window_bounds = array<i64: 1, 4, 8, 8>}, {transform_indices = @transform_1, window_bounds = array<i64: 1, 4, 8, 8>}, {transform_indices = @transform_2, window_bounds = array<i64: 1, 4, 8, 8>}, {pipeline_mode = #tpu.pipeline_mode<synchronous>, transform_indices = @transform_3, window_bounds = array<i64: 4, 8, 32>}, {pipeline_mode = #tpu.pipeline_mode<synchronous>, transform_indices = @transform_4, window_bounds = array<i64: 1, 32>}, {transform_indices = @transform_5, window_bounds = array<i64: 1, 8, 32>}]} {
    %c0_i32 = arith.constant 0 : i32
    %0 = arith.cmpi eq, %arg2, %c0_i32 : i32
    %1 = arith.extui %0 : i1 to i32
    %c0_i32_0 = arith.constant 0 : i32
    %2 = arith.cmpi ne, %1, %c0_i32_0 : i32
    scf.if %2 {
      %cst_35 = arith.constant -1.000000e+30 : f32
      %36 = vector.broadcast %cst_35 : f32 to vector<4x8x1xf32>
      %c0_36 = arith.constant 0 : index
      %c0_37 = arith.constant 0 : index
      %c0_38 = arith.constant 0 : index
      %37 = vector.load %arg9[%c0_36, %c0_37, %c0_38] : memref<4x8x1xf32, #tpu.memory_space<vmem>>, vector<4x8x1xf32>
      tpu.vector_store %arg9[%c0_36, %c0_37, %c0_38], %36 {strides = array<i32>} : memref<4x8x1xf32, #tpu.memory_space<vmem>>, vector<4x8x1xf32>,
      %cst_39 = arith.constant 0.000000e+00 : f32
      %38 = vector.broadcast %cst_39 : f32 to vector<4x8x1xf32>
      %c0_40 = arith.constant 0 : index
      %c0_41 = arith.constant 0 : index
      %c0_42 = arith.constant 0 : index
      %39 = vector.load %arg10[%c0_40, %c0_41, %c0_42] : memref<4x8x1xf32, #tpu.memory_space<vmem>>, vector<4x8x1xf32>
      tpu.vector_store %arg10[%c0_40, %c0_41, %c0_42], %38 {strides = array<i32>} : memref<4x8x1xf32, #tpu.memory_space<vmem>>, vector<4x8x1xf32>,
      %cst_43 = arith.constant 0.000000e+00 : f32
      %40 = vector.broadcast %cst_43 : f32 to vector<4x8x8xf32>
      %c0_44 = arith.constant 0 : index
      %c0_45 = arith.constant 0 : index
      %c0_46 = arith.constant 0 : index
      %41 = vector.load %arg11[%c0_44, %c0_45, %c0_46] : memref<4x8x8xf32, #tpu.memory_space<vmem>>, vector<4x8x8xf32>
      tpu.vector_store %arg11[%c0_44, %c0_45, %c0_46], %40 {strides = array<i32>} : memref<4x8x8xf32, #tpu.memory_space<vmem>>, vector<4x8x8xf32>,
    } else {
    }
    %c0 = arith.constant 0 : index
    %c0_1 = arith.constant 0 : index
    %c0_2 = arith.constant 0 : index
    %c0_3 = arith.constant 0 : index
    %3 = vector.load %arg3[%c0, %c0_1, %c0_2, %c0_3] : memref<1x4x8x8xbf16, #tpu.memory_space<vmem>>, vector<1x4x8x8xbf16>
    %4 = vector.shape_cast %3 : vector<1x4x8x8xbf16> to vector<4x8x8xbf16>
    %c0_4 = arith.constant 0 : index
    %c0_5 = arith.constant 0 : index
    %c0_6 = arith.constant 0 : index
    %c0_7 = arith.constant 0 : index
    %5 = vector.load %arg4[%c0_4, %c0_5, %c0_6, %c0_7] : memref<1x4x8x8xbf16, #tpu.memory_space<vmem>>, vector<1x4x8x8xbf16>
    %6 = vector.shape_cast %5 : vector<1x4x8x8xbf16> to vector<4x8x8xbf16>
    %c0_8 = arith.constant 0 : index
    %c0_9 = arith.constant 0 : index
    %c0_10 = arith.constant 0 : index
    %c0_11 = arith.constant 0 : index
    %7 = vector.load %arg5[%c0_8, %c0_9, %c0_10, %c0_11] : memref<1x4x8x8xbf16, #tpu.memory_space<vmem>>, vector<1x4x8x8xbf16>
    %8 = vector.shape_cast %7 : vector<1x4x8x8xbf16> to vector<4x8x8xbf16>
    %cst = arith.constant dense<0.000000e+00> : vector<4x8x8xf32>
    %9 = tpu.matmul %4, %6, %cst {dimension_numbers = #tpu.dot_dimension_numbers<[2], [2], [1], [1], [0, 0, 0, 1, 1, 1], [0], [0]>} : vector<4x8x8xbf16>, vector<4x8x8xbf16>, vector<4x8x8xf32> -> vector<4x8x8xf32>
    %c0_12 = arith.constant 0 : index
    %c0_13 = arith.constant 0 : index
    %c0_14 = arith.constant 0 : index
    %10 = vector.load %arg9[%c0_12, %c0_13, %c0_14] : memref<4x8x1xf32, #tpu.memory_space<vmem>>, vector<4x8x1xf32>
    %cst_15 = arith.constant dense<0xFF800000> : vector<4x8xf32>
    %11 = vector.multi_reduction <maximumf>, %9, %cst_15 [2] : vector<4x8x8xf32> to vector<4x8xf32>
    %12 = vector.shape_cast %11 : vector<4x8xf32> to vector<4x8x1xf32>
    %13 = arith.maximumf %10, %12 : vector<4x8x1xf32>
    %14 = arith.subf %10, %13 : vector<4x8x1xf32>
    %15 = math.exp2 %14 : vector<4x8x1xf32>
    %16 = vector.broadcast %13 : vector<4x8x1xf32> to vector<4x8x8xf32>
    %17 = arith.subf %9, %16 : vector<4x8x8xf32>
    %18 = math.exp2 %17 : vector<4x8x8xf32>
    %c0_16 = arith.constant 0 : index
    %c0_17 = arith.constant 0 : index
    %c0_18 = arith.constant 0 : index
    %19 = vector.load %arg10[%c0_16, %c0_17, %c0_18] : memref<4x8x1xf32, #tpu.memory_space<vmem>>, vector<4x8x1xf32>
    %20 = arith.mulf %15, %19 : vector<4x8x1xf32>
    %cst_19 = arith.constant dense<0.000000e+00> : vector<4x8xf32>
    %21 = vector.multi_reduction <add>, %18, %cst_19 [2] : vector<4x8x8xf32> to vector<4x8xf32>
    %22 = vector.shape_cast %21 : vector<4x8xf32> to vector<4x8x1xf32>
    %23 = arith.addf %20, %22 : vector<4x8x1xf32>
    %c0_20 = arith.constant 0 : index
    %c0_21 = arith.constant 0 : index
    %c0_22 = arith.constant 0 : index
    %24 = vector.load %arg10[%c0_20, %c0_21, %c0_22] : memref<4x8x1xf32, #tpu.memory_space<vmem>>, vector<4x8x1xf32>
    tpu.vector_store %arg10[%c0_20, %c0_21, %c0_22], %23 {strides = array<i32>} : memref<4x8x1xf32, #tpu.memory_space<vmem>>, vector<4x8x1xf32>,
    %25 = arith.truncf %18 : vector<4x8x8xf32> to vector<4x8x8xbf16>
    %cst_23 = arith.constant dense<0.000000e+00> : vector<4x8x8xf32>
    %26 = tpu.matmul %25, %8, %cst_23 {dimension_numbers = #tpu.dot_dimension_numbers<[2], [1], [1], [2], [0, 0, 0, 1, 1, 2], [0], [0]>} : vector<4x8x8xbf16>, vector<4x8x8xbf16>, vector<4x8x8xf32> -> vector<4x8x8xf32>
    %c0_24 = arith.constant 0 : index
    %c0_25 = arith.constant 0 : index
    %c0_26 = arith.constant 0 : index
    %27 = vector.load %arg11[%c0_24, %c0_25, %c0_26] : memref<4x8x8xf32, #tpu.memory_space<vmem>>, vector<4x8x8xf32>
    %28 = vector.broadcast %15 : vector<4x8x1xf32> to vector<4x8x8xf32>
    %29 = arith.mulf %28, %27 : vector<4x8x8xf32>
    %30 = arith.addf %29, %26 : vector<4x8x8xf32>
    %c0_27 = arith.constant 0 : index
    %c0_28 = arith.constant 0 : index
    %c0_29 = arith.constant 0 : index
    %31 = vector.load %arg11[%c0_27, %c0_28, %c0_29] : memref<4x8x8xf32, #tpu.memory_space<vmem>>, vector<4x8x8xf32>
    tpu.vector_store %arg11[%c0_27, %c0_28, %c0_29], %30 {strides = array<i32>} : memref<4x8x8xf32, #tpu.memory_space<vmem>>, vector<4x8x8xf32>,
    %c0_30 = arith.constant 0 : index
    %c0_31 = arith.constant 0 : index
    %c0_32 = arith.constant 0 : index
    %32 = vector.load %arg9[%c0_30, %c0_31, %c0_32] : memref<4x8x1xf32, #tpu.memory_space<vmem>>, vector<4x8x1xf32>
    tpu.vector_store %arg9[%c0_30, %c0_31, %c0_32], %13 {strides = array<i32>} : memref<4x8x1xf32, #tpu.memory_space<vmem>>, vector<4x8x1xf32>,
    %c0_i32_33 = arith.constant 0 : i32
    %33 = arith.cmpi eq, %arg2, %c0_i32_33 : i32
    %34 = arith.extui %33 : i1 to i32
    %c0_i32_34 = arith.constant 0 : i32
    %35 = arith.cmpi ne, %34, %c0_i32_34 : i32
    scf.if %35 {
      %c0_35 = arith.constant 0 : index
      %c0_36 = arith.constant 0 : index
      %c0_37 = arith.constant 0 : index
      %36 = vector.load %arg10[%c0_35, %c0_36, %c0_37] : memref<4x8x1xf32, #tpu.memory_space<vmem>>, vector<4x8x1xf32>
      %37 = tpu.reciprocal %36 {approx = true} : vector<4x8x1xf32> -> vector<4x8x1xf32>
      %c0_38 = arith.constant 0 : index
      %c0_39 = arith.constant 0 : index
      %c0_40 = arith.constant 0 : index
      %38 = vector.load %arg11[%c0_38, %c0_39, %c0_40] : memref<4x8x8xf32, #tpu.memory_space<vmem>>, vector<4x8x8xf32>
      %39 = vector.broadcast %37 : vector<4x8x1xf32> to vector<4x8x8xf32>
      %40 = arith.mulf %38, %39 : vector<4x8x8xf32>
      %41 = arith.truncf %40 : vector<4x8x8xf32> to vector<4x8x8xbf16>
      %42 = vector.extract_strided_slice %41 {offsets = [0, 0, 0], sizes = [1, 8, 8], strides = [1, 1, 1]} : vector<4x8x8xbf16> to vector<1x8x8xbf16>
      %43 = vector.shape_cast %42 : vector<1x8x8xbf16> to vector<8x8xbf16>
      %c0_41 = arith.constant 0 : index
      %c0_42 = arith.constant 0 : index
      %c0_43 = arith.constant 0 : index
      %44 = vector.load %arg6[%c0_41, %c0_42, %c0_43] : memref<4x8x32xbf16, #tpu.memory_space<vmem>>, vector<1x8x32xbf16>
      %45 = vector.shape_cast %44 : vector<1x8x32xbf16> to vector<8x32xbf16>
      %cst_44 = arith.constant dense<0.000000e+00> : vector<8x32xf32>
      %46 = tpu.matmul %43, %45, %cst_44 {dimension_numbers = #tpu.dot_dimension_numbers<[1], [0], [0], [1], [0, 0, 1, 1], [], []>} : vector<8x8xbf16>, vector<8x32xbf16>, vector<8x32xf32> -> vector<8x32xf32>
      %47 = vector.extract_strided_slice %41 {offsets = [1, 0, 0], sizes = [1, 8, 8], strides = [1, 1, 1]} : vector<4x8x8xbf16> to vector<1x8x8xbf16>
      %48 = vector.shape_cast %47 : vector<1x8x8xbf16> to vector<8x8xbf16>
      %c1 = arith.constant 1 : index
      %c0_45 = arith.constant 0 : index
      %c0_46 = arith.constant 0 : index
      %49 = vector.load %arg6[%c1, %c0_45, %c0_46] : memref<4x8x32xbf16, #tpu.memory_space<vmem>>, vector<1x8x32xbf16>
      %50 = vector.shape_cast %49 : vector<1x8x32xbf16> to vector<8x32xbf16>
      %cst_47 = arith.constant dense<0.000000e+00> : vector<8x32xf32>
      %51 = tpu.matmul %48, %50, %cst_47 {dimension_numbers = #tpu.dot_dimension_numbers<[1], [0], [0], [1], [0, 0, 1, 1], [], []>} : vector<8x8xbf16>, vector<8x32xbf16>, vector<8x32xf32> -> vector<8x32xf32>
      %52 = arith.addf %46, %51 : vector<8x32xf32>
      %53 = vector.extract_strided_slice %41 {offsets = [2, 0, 0], sizes = [1, 8, 8], strides = [1, 1, 1]} : vector<4x8x8xbf16> to vector<1x8x8xbf16>
      %54 = vector.shape_cast %53 : vector<1x8x8xbf16> to vector<8x8xbf16>
      %c2 = arith.constant 2 : index
      %c0_48 = arith.constant 0 : index
      %c0_49 = arith.constant 0 : index
      %55 = vector.load %arg6[%c2, %c0_48, %c0_49] : memref<4x8x32xbf16, #tpu.memory_space<vmem>>, vector<1x8x32xbf16>
      %56 = vector.shape_cast %55 : vector<1x8x32xbf16> to vector<8x32xbf16>
      %cst_50 = arith.constant dense<0.000000e+00> : vector<8x32xf32>
      %57 = tpu.matmul %54, %56, %cst_50 {dimension_numbers = #tpu.dot_dimension_numbers<[1], [0], [0], [1], [0, 0, 1, 1], [], []>} : vector<8x8xbf16>, vector<8x32xbf16>, vector<8x32xf32> -> vector<8x32xf32>
      %58 = arith.addf %52, %57 : vector<8x32xf32>
      %59 = vector.extract_strided_slice %41 {offsets = [3, 0, 0], sizes = [1, 8, 8], strides = [1, 1, 1]} : vector<4x8x8xbf16> to vector<1x8x8xbf16>
      %60 = vector.shape_cast %59 : vector<1x8x8xbf16> to vector<8x8xbf16>
      %c3 = arith.constant 3 : index
      %c0_51 = arith.constant 0 : index
      %c0_52 = arith.constant 0 : index
      %61 = vector.load %arg6[%c3, %c0_51, %c0_52] : memref<4x8x32xbf16, #tpu.memory_space<vmem>>, vector<1x8x32xbf16>
      %62 = vector.shape_cast %61 : vector<1x8x32xbf16> to vector<8x32xbf16>
      %cst_53 = arith.constant dense<0.000000e+00> : vector<8x32xf32>
      %63 = tpu.matmul %60, %62, %cst_53 {dimension_numbers = #tpu.dot_dimension_numbers<[1], [0], [0], [1], [0, 0, 1, 1], [], []>} : vector<8x8xbf16>, vector<8x32xbf16>, vector<8x32xf32> -> vector<8x32xf32>
      %64 = arith.addf %58, %63 : vector<8x32xf32>
      %c0_54 = arith.constant 0 : index
      %c0_55 = arith.constant 0 : index
      %65 = vector.load %arg7[%c0_54, %c0_55] : memref<1x32xf32, #tpu.memory_space<vmem>>, vector<1x32xf32>
      %66 = vector.broadcast %65 : vector<1x32xf32> to vector<8x32xf32>
      %67 = arith.addf %64, %66 : vector<8x32xf32>
      %c0_56 = arith.constant 0 : index
      %c0_57 = arith.constant 0 : index
      %c0_58 = arith.constant 0 : index
      %68 = vector.load %arg8[%c0_56, %c0_57, %c0_58] : memref<1x8x32xf32, #tpu.memory_space<vmem>>, vector<1x8x32xf32>
      %69 = vector.shape_cast %68 : vector<1x8x32xf32> to vector<8x32xf32>
      %70 = vector.shape_cast %67 : vector<8x32xf32> to vector<1x8x32xf32>
      tpu.vector_store %arg8[%c0_56, %c0_57, %c0_58], %70 {strides = array<i32>} : memref<1x8x32xf32, #tpu.memory_space<vmem>>, vector<1x8x32xf32>,
    } else {
    }
    return
  }
  func.func @transform_0(%arg0: i32, %arg1: i32, %arg2: i32) -> (i32, i32, i32, i32) {
    %c0_i32 = arith.constant 0 : i32
    %c0_i32_0 = arith.constant 0 : i32
    %c0_i32_1 = arith.constant 0 : i32
    return %arg0, %c0_i32, %arg1, %c0_i32_0 : i32, i32, i32, i32
  }
  func.func @transform_1(%arg0: i32, %arg1: i32, %arg2: i32) -> (i32, i32, i32, i32) {
    %c0_i32 = arith.constant 0 : i32
    %c0_i32_0 = arith.constant 0 : i32
    %c0_i32_1 = arith.constant 0 : i32
    return %arg0, %c0_i32, %arg2, %c0_i32_0 : i32, i32, i32, i32
  }
  func.func @transform_2(%arg0: i32, %arg1: i32, %arg2: i32) -> (i32, i32, i32, i32) {
    %c0_i32 = arith.constant 0 : i32
    %c0_i32_0 = arith.constant 0 : i32
    %c0_i32_1 = arith.constant 0 : i32
    return %arg0, %c0_i32, %arg2, %c0_i32_0 : i32, i32, i32, i32
  }
  func.func @transform_3(%arg0: i32, %arg1: i32, %arg2: i32) -> (i32, i32, i32) {
    %c0_i32 = arith.constant 0 : i32
    %c0_i32_0 = arith.constant 0 : i32
    %c0_i32_1 = arith.constant 0 : i32
    %c0_i32_2 = arith.constant 0 : i32
    return %c0_i32, %c0_i32_0, %c0_i32_1 : i32, i32, i32
  }
  func.func @transform_4(%arg0: i32, %arg1: i32, %arg2: i32) -> (i32, i32) {
    %c0_i32 = arith.constant 0 : i32
    %c0_i32_0 = arith.constant 0 : i32
    %c0_i32_1 = arith.constant 0 : i32
    return %c0_i32, %c0_i32_0 : i32, i32
  }
  func.func @transform_5(%arg0: i32, %arg1: i32, %arg2: i32) -> (i32, i32, i32) {
    %c0_i32 = arith.constant 0 : i32
    %c0_i32_0 = arith.constant 0 : i32
    return %arg0, %arg1, %c0_i32 : i32, i32, i32
  }
}

</mosaic_0001>

<llo_original>
// kernel: attention_with_dropout.1
$region0: #{attention_with_dropout.1}
  #allocation0 [shape = 'u32[]', space=smem, size = 0x4, offset = 0x4, fixed_abs, tag = 'smem constant byte address 0x4 - core index']
  #allocation1 [shape = 'u32[144,128]{1,0:T(1,128)}', space=vmem, size = 0x12000, scoped, tag = 'internal scratch']
  #allocation2 [shape = 'f32[4,8,1]{2,1,0:T(8,128)}', space=vmem, size = 0x4000, scoped, tag = 'scratch operand']
  #allocation3 [shape = 'f32[4,8,1]{2,1,0:T(8,128)}', space=vmem, size = 0x4000, scoped, tag = 'scratch operand']
  #allocation4 [shape = 'f32[4,8,8]{2,1,0:T(8,128)}', space=vmem, size = 0x4000, scoped, tag = 'scratch operand']
  %s0 = inlined_call_operand.vmem [shape: bf16[2,4,8,8], index: 0, kind: input, shape index: {}]
  %s1 = inlined_call_operand.vmem [shape: bf16[2,4,8,8], index: 1, kind: input, shape index: {}]
  %s2 = inlined_call_operand.vmem [shape: bf16[2,4,8,8], index: 2, kind: input, shape index: {}]
  %s3 = inlined_call_operand.vmem [shape: bf16[4,8,32], index: 3, kind: input, shape index: {}]
  %s4 = inlined_call_operand.vmem [shape: f32[1,32], index: 4, kind: input, shape index: {}]
  %s5 = inlined_call_operand.hbm [shape: f32[2,8,32], index: 5, kind: output, shape index: {}]
  %s6 = sld [smem:[#allocation0]]
  $region61: #{attention_with_dropout.1} parent=0
    _
  %s8 = ssub.s32 1, %s6
  %s9 = scalar_select 0, %s8, %s6
  $region1: #{attention_with_dropout.1} parent=0
    #allocation5 [shape = 'u8[8192]{0}', space=vmem, size = 0x2000, scoped, tag = 'output window, operand 0']
    #allocation6 [shape = 's32[2]{0}', space=sflag, size = 0x8, scoped, tag = 'scoped memory for attention_with_dropout.1']
    %10 = vsyncpa [#allocation6], 0
    %s11 = scalar_lea.sflag [#allocation6], 1
    %12 = vsyncpa %s11, 0
    loop: start=0, step=1, limit=4
    $region2: #{attention_with_dropout.1} parent=1 // loop_pre_header
      _
    $region3: #{attention_with_dropout.1} parent=1 // loop_header
      %s14 = sphi 0, %s18
      %p15 = scmp.ge.s32.totalorder %s14, 4
      %s21 = sphi 0, %s40
      %s22 = sphi 0, %s36
      %s23 = sphi 0, %s32
      %s24 = sphi 0, %s21
      %s25 = sphi 0, %s22
      %s26 = sphi 0, %s23
      %s27 = sphi 0, %s24
      %s28 = sphi 0, %s25
      %s29 = sphi 0, %s26
      %s45 = sphi 0, %s47
      %s48 = sphi 0, %s45
      %s49 = sphi 0, %s48
      %s65 = sphi 0, %s49
      %s73 = sphi 0, %s75
      %s76 = sphi 0, %s73
      %s77 = sphi 0, %s76
      %s93 = sphi 0, %s77
      %s101 = sphi 0, %s103
      %s104 = sphi 0, %s101
      %s105 = sphi 0, %s104
      %s121 = sphi 0, %s105
      %s125 = sphi 0, %s125
      %s127 = sphi 0, %s125
      %s128 = sphi 0, %s127
      %s142 = sphi 0, %s128
      %s146 = sphi 0, %s146
      %s148 = sphi 0, %s146
      %s149 = sphi 0, %s148
      %s163 = sphi 0, %s149
      %s171 = sphi 0, %s173
      %s174 = sphi 0, %s171
      %s175 = sphi 0, %s174
      %s191 = sphi 0, %s175
    $region4: #{attention_with_dropout.1} parent=1 // loop_header_branch
      %17 = sbr.rel (%p15) target = $region8
    $region5: #{attention_with_dropout.1} parent=1 // loop_body
      %s19 = ssub.s32 %s14, 1
      %s20 = ssub.s32 %s14, 2
      %s30 = sadd.s32 1, %s23
      %p31 = scmp.ge.s32.totalorder %s30, 1
      %s32 = scalar_select %p31, 0, %s30
      %s33 = sadd.s32 1, %s22
      %s34 = scalar_select %p31, %s33, %s22
      %p35 = scmp.ge.s32.totalorder %s34, 1
      %s36 = scalar_select %p35, 0, %s34
      %s37 = sadd.s32 1, %s21
      %s38 = scalar_select %p35, %s37, %s21
      %p39 = scmp.ge.s32.totalorder %s38, 2
      %s40 = scalar_select %p39, 0, %s38
      %s41 = ssub.s32 %s21, %s40
      %s42 = ssub.s32 %s22, %s36
      %s43 = sor.u32 %s41, %s42
      %p44 = scmp.eq.s32.totalorder %s43, 0
      %s46 = sadd.s32 %s45, 1
      %s47 = scalar_select %p44, %s45, %s46
      %p50 = pneg %p44
      %p51 = scmp.eq.s32.totalorder %s14, 1
      %p52 = por %p50, %p51
      %p53 = scmp.ne.s32.totalorder %s45, %s48
      %p54 = scmp.eq.s32.totalorder %s14, 0
      %p55 = por %p53, %p54
      %p56 = scmp.ne.s32.totalorder %s45, %s48
      %p57 = scmp.eq.s32.totalorder %s19, 1
      %p58 = por %p56, %p57
      %p59 = scmp.ne.s32.totalorder %s48, %s49
      %p60 = scmp.eq.s32.totalorder %s19, 0
      %p61 = por %p59, %p60
      %p62 = scmp.ne.s32.totalorder %s48, %s49
      %p63 = scmp.eq.s32.totalorder %s20, 1
      %p64 = por %p62, %p63
      %p66 = scmp.ne.s32.totalorder %s49, %s65
      %p67 = scmp.eq.s32.totalorder %s20, 0
      %p68 = por %p66, %p67
      %s69 = ssub.s32 %s21, %s40
      %s70 = ssub.s32 %s23, %s32
      %s71 = sor.u32 %s69, %s70
      %p72 = scmp.eq.s32.totalorder %s71, 0
      %s74 = sadd.s32 %s73, 1
      %s75 = scalar_select %p72, %s73, %s74
      %p78 = pneg %p72
      %p79 = scmp.eq.s32.totalorder %s14, 1
      %p80 = por %p78, %p79
      %p81 = scmp.ne.s32.totalorder %s73, %s76
      %p82 = scmp.eq.s32.totalorder %s14, 0
      %p83 = por %p81, %p82
      %p84 = scmp.ne.s32.totalorder %s73, %s76
      %p85 = scmp.eq.s32.totalorder %s19, 1
      %p86 = por %p84, %p85
      %p87 = scmp.ne.s32.totalorder %s76, %s77
      %p88 = scmp.eq.s32.totalorder %s19, 0
      %p89 = por %p87, %p88
      %p90 = scmp.ne.s32.totalorder %s76, %s77
      %p91 = scmp.eq.s32.totalorder %s20, 1
      %p92 = por %p90, %p91
      %p94 = scmp.ne.s32.totalorder %s77, %s93
      %p95 = scmp.eq.s32.totalorder %s20, 0
      %p96 = por %p94, %p95
      %s97 = ssub.s32 %s21, %s40
      %s98 = ssub.s32 %s23, %s32
      %s99 = sor.u32 %s97, %s98
      %p100 = scmp.eq.s32.totalorder %s99, 0
      %s102 = sadd.s32 %s101, 1
      %s103 = scalar_select %p100, %s101, %s102
      %p106 = pneg %p100
      %p107 = scmp.eq.s32.totalorder %s14, 1
      %p108 = por %p106, %p107
      %p109 = scmp.ne.s32.totalorder %s101, %s104
      %p110 = scmp.eq.s32.totalorder %s14, 0
      %p111 = por %p109, %p110
      %p112 = scmp.ne.s32.totalorder %s101, %s104
      %p113 = scmp.eq.s32.totalorder %s19, 1
      %p114 = por %p112, %p113
      %p115 = scmp.ne.s32.totalorder %s104, %s105
      %p116 = scmp.eq.s32.totalorder %s19, 0
      %p117 = por %p115, %p116
      %p118 = scmp.ne.s32.totalorder %s104, %s105
      %p119 = scmp.eq.s32.totalorder %s20, 1
      %p120 = por %p118, %p119
      %p122 = scmp.ne.s32.totalorder %s105, %s121
      %p123 = scmp.eq.s32.totalorder %s20, 0
      %p124 = por %p122, %p123
      %s126 = sadd.s32 %s125, 1
      %p129 = scmp.eq.s32.totalorder %s14, 1
      %p130 = scmp.ne.s32.totalorder %s125, %s127
      %p131 = scmp.eq.s32.totalorder %s14, 0
      %p132 = por %p130, %p131
      %p133 = scmp.ne.s32.totalorder %s125, %s127
      %p134 = scmp.eq.s32.totalorder %s19, 1
      %p135 = por %p133, %p134
      %p136 = scmp.ne.s32.totalorder %s127, %s128
      %p137 = scmp.eq.s32.totalorder %s19, 0
      %p138 = por %p136, %p137
      %p139 = scmp.ne.s32.totalorder %s127, %s128
      %p140 = scmp.eq.s32.totalorder %s20, 1
      %p141 = por %p139, %p140
      %p143 = scmp.ne.s32.totalorder %s128, %s142
      %p144 = scmp.eq.s32.totalorder %s20, 0
      %p145 = por %p143, %p144
      %s147 = sadd.s32 %s146, 1
      %p150 = scmp.eq.s32.totalorder %s14, 1
      %p151 = scmp.ne.s32.totalorder %s146, %s148
      %p152 = scmp.eq.s32.totalorder %s14, 0
      %p153 = por %p151, %p152
      %p154 = scmp.ne.s32.totalorder %s146, %s148
      %p155 = scmp.eq.s32.totalorder %s19, 1
      %p156 = por %p154, %p155
      %p157 = scmp.ne.s32.totalorder %s148, %s149
      %p158 = scmp.eq.s32.totalorder %s19, 0
      %p159 = por %p157, %p158
      %p160 = scmp.ne.s32.totalorder %s148, %s149
      %p161 = scmp.eq.s32.totalorder %s20, 1
      %p162 = por %p160, %p161
      %p164 = scmp.ne.s32.totalorder %s149, %s163
      %p165 = scmp.eq.s32.totalorder %s20, 0
      %p166 = por %p164, %p165
      %s167 = ssub.s32 %s21, %s40
      %s168 = ssub.s32 %s22, %s36
      %s169 = sor.u32 %s167, %s168
      %p170 = scmp.eq.s32.totalorder %s169, 0
      %s172 = sadd.s32 %s171, 1
      %s173 = scalar_select %p170, %s171, %s172
      %p176 = pneg %p170
      %p177 = scmp.eq.s32.totalorder %s14, 1
      %p178 = por %p176, %p177
      %p179 = scmp.ne.s32.totalorder %s171, %s174
      %p180 = scmp.eq.s32.totalorder %s14, 0
      %p181 = por %p179, %p180
      %p182 = scmp.ne.s32.totalorder %s171, %s174
      %p183 = scmp.eq.s32.totalorder %s19, 1
      %p184 = por %p182, %p183
      %p185 = scmp.ne.s32.totalorder %s174, %s175
      %p186 = scmp.eq.s32.totalorder %s19, 0
      %p187 = por %p185, %p186
      %p188 = scmp.ne.s32.totalorder %s174, %s175
      %p189 = scmp.eq.s32.totalorder %s20, 1
      %p190 = por %p188, %p189
      %p192 = scmp.ne.s32.totalorder %s175, %s191
      %p193 = scmp.eq.s32.totalorder %s20, 0
      %p194 = por %p192, %p193
      %p195 = scmp.le.s32.totalorder 1, %s14
      %p196 = scmp.lt.s32.totalorder %s14, 3
      %p197 = pnand %p195, %p196
      %p198 = pneg %p197
      // Predicated region
      $region9: #{attention_with_dropout.1} parent=5 // pred_check
        _
      $region10: #{attention_with_dropout.1} parent=5 // pred_check_branch
        %200 = sbr.rel (%p197) target = $region12
      $region11: #{attention_with_dropout.1} parent=5 // pred_region
        %s201 = ssub.s32 %s14, 1
        // Predicated region
        $region13: #{attention_with_dropout.1} parent=11 // pred_check
          %p202 = pneg %p138
        $region14: #{attention_with_dropout.1} parent=11 // pred_check_branch
          %204 = sbr.rel (%p202) target = $region16
        $region15: #{attention_with_dropout.1} parent=11 // pred_region
          _
        $region16: #{attention_with_dropout.1} parent=11 // pred_fallthru
          _
        // Predicated region
        $region17: #{attention_with_dropout.1} parent=11 // pred_check
          %p205 = pneg %p159
        $region18: #{attention_with_dropout.1} parent=11 // pred_check_branch
          %207 = sbr.rel (%p205) target = $region20
        $region19: #{attention_with_dropout.1} parent=11 // pred_region
          _
        $region20: #{attention_with_dropout.1} parent=11 // pred_fallthru
          _
      $region12: #{attention_with_dropout.1} parent=5 // pred_fallthru
        _
      %p208 = scmp.lt.s32.totalorder %s14, 2
      // Predicated region
      $region21: #{attention_with_dropout.1} parent=5 // pred_check
        %p209 = pneg %p208
      $region22: #{attention_with_dropout.1} parent=5 // pred_check_branch
        %211 = sbr.rel (%p209) target = $region24
      $region23: #{attention_with_dropout.1} parent=5 // pred_region
        // Predicated region
        $region25: #{attention_with_dropout.1} parent=23 // pred_check
          %p212 = pneg %p55
        $region26: #{attention_with_dropout.1} parent=23 // pred_check_branch
          %214 = sbr.rel (%p212) target = $region28
        $region27: #{attention_with_dropout.1} parent=23 // pred_region
          %p215 = scmp.lt.s32.totalorder %s21, 1
          %s216 = scalar_select %p215, %s21, 1
          %p217 = scmp.lt.s32.totalorder %s22, 0
          %s218 = scalar_select %p217, %s22, 0
          %s219 = smul.addr %s216, 4
          %s220 = sadd.s32 %s218, %s219
          %s221 = smul.addr %s220, 4
          %s222 = scalar_lea.vmem %s0, %s221
        $region28: #{attention_with_dropout.1} parent=23 // pred_fallthru
          _
        // Predicated region
        $region29: #{attention_with_dropout.1} parent=23 // pred_check
          %p223 = pneg %p83
        $region30: #{attention_with_dropout.1} parent=23 // pred_check_branch
          %225 = sbr.rel (%p223) target = $region32
        $region31: #{attention_with_dropout.1} parent=23 // pred_region
          %p226 = scmp.lt.s32.totalorder %s21, 1
          %s227 = scalar_select %p226, %s21, 1
          %p228 = scmp.lt.s32.totalorder %s23, 0
          %s229 = scalar_select %p228, %s23, 0
          %s230 = smul.addr %s227, 4
          %s231 = sadd.s32 %s229, %s230
          %s232 = smul.addr %s231, 4
          %s233 = scalar_lea.vmem %s1, %s232
        $region32: #{attention_with_dropout.1} parent=23 // pred_fallthru
          _
        // Predicated region
        $region33: #{attention_with_dropout.1} parent=23 // pred_check
          %p234 = pneg %p111
        $region34: #{attention_with_dropout.1} parent=23 // pred_check_branch
          %236 = sbr.rel (%p234) target = $region36
        $region35: #{attention_with_dropout.1} parent=23 // pred_region
          %p237 = scmp.lt.s32.totalorder %s21, 1
          %s238 = scalar_select %p237, %s21, 1
          %p239 = scmp.lt.s32.totalorder %s23, 0
          %s240 = scalar_select %p239, %s23, 0
          %s241 = smul.addr %s238, 4
          %s242 = sadd.s32 %s240, %s241
          %s243 = smul.addr %s242, 4
          %s244 = scalar_lea.vmem %s2, %s243
        $region36: #{attention_with_dropout.1} parent=23 // pred_fallthru
          _
      $region24: #{attention_with_dropout.1} parent=5 // pred_fallthru
        _
      %p245 = scmp.le.s32.totalorder 1, %s14
      %p246 = scmp.lt.s32.totalorder %s14, 3
      %p247 = pnand %p245, %p246
      %p248 = pneg %p247
      // Predicated region
      $region37: #{attention_with_dropout.1} parent=5 // pred_check
        _
      $region38: #{attention_with_dropout.1} parent=5 // pred_check_branch
        %250 = sbr.rel (%p247) target = $region40
      $region39: #{attention_with_dropout.1} parent=5 // pred_region
        %s251 = ssub.s32 %s14, 1
        %p252 = scmp.lt.s32.totalorder %s24, 1
        %s253 = scalar_select %p252, %s24, 1
        %p254 = scmp.lt.s32.totalorder %s25, 0
        %s255 = scalar_select %p254, %s25, 0
        %s256 = smul.addr %s253, 4
        %s257 = sadd.s32 %s255, %s256
        %s258 = smul.addr %s257, 4
        %s259 = scalar_lea.vmem %s0, %s258
        %p260 = pneg %p61
        %p261 = pneg %p58
        %p262 = scmp.lt.s32.totalorder %s24, 1
        %s263 = scalar_select %p262, %s24, 1
        %p264 = scmp.lt.s32.totalorder %s26, 0
        %s265 = scalar_select %p264, %s26, 0
        %s266 = smul.addr %s263, 4
        %s267 = sadd.s32 %s265, %s266
        %s268 = smul.addr %s267, 4
        %s269 = scalar_lea.vmem %s1, %s268
        %p270 = pneg %p89
        %p271 = pneg %p86
        %p272 = scmp.lt.s32.totalorder %s24, 1
        %s273 = scalar_select %p272, %s24, 1
        %p274 = scmp.lt.s32.totalorder %s26, 0
        %s275 = scalar_select %p274, %s26, 0
        %s276 = smul.addr %s273, 4
        %s277 = sadd.s32 %s275, %s276
        %s278 = smul.addr %s277, 4
        %s279 = scalar_lea.vmem %s2, %s278
        %p280 = pneg %p117
        %p281 = pneg %p114
        %p282 = pneg %p138
        %p283 = pneg %p135
        %p284 = pneg %p159
        %p285 = pneg %p156
        %p286 = pneg %p187
        %p287 = pneg %p184
        %s288 = sand.u32 %s174, 1
        %s289 = scalar_lea.sflag [#allocation6], %s288
        %s290 = sand.u32 %s174, 1
        %s291 = smul.addr %s290, 8
        %s292 = scalar_lea.vmem [#allocation5], %s291
        %p293 = scmp.lt.s32.totalorder %s24, 1
        %s294 = scalar_select %p293, %s24, 1
        %p295 = scmp.lt.s32.totalorder %s25, 0
        %s296 = scalar_select %p295, %s25, 0
        %s297 = smul.addr %s294, 4
        %s298 = sadd.s32 %s296, %s297
        %s299 = smul.addr %s298, 4
        %s300 = scalar_lea.vmem %s0, %s299
        %p301 = scmp.lt.s32.totalorder %s24, 1
        %s302 = scalar_select %p301, %s24, 1
        %p303 = scmp.lt.s32.totalorder %s26, 0
        %s304 = scalar_select %p303, %s26, 0
        %s305 = smul.addr %s302, 4
        %s306 = sadd.s32 %s304, %s305
        %s307 = smul.addr %s306, 4
        %s308 = scalar_lea.vmem %s1, %s307
        %p309 = scmp.lt.s32.totalorder %s24, 1
        %s310 = scalar_select %p309, %s24, 1
        %p311 = scmp.lt.s32.totalorder %s26, 0
        %s312 = scalar_select %p311, %s26, 0
        %s313 = smul.addr %s310, 4
        %s314 = sadd.s32 %s312, %s313
        %s315 = smul.addr %s314, 4
        %s316 = scalar_lea.vmem %s2, %s315
        %p318 = scmp.eq.s32.totalorder %s26, 0
        // Predicated region
        $region41: #{attention_with_dropout.1} parent=39 // pred_check
          %p319 = pneg %p318
        $region42: #{attention_with_dropout.1} parent=39 // pred_check_branch
          %321 = sbr.rel (%p319) target = $region44
        $region43: #{attention_with_dropout.1} parent=39 // pred_region
          %vm322 = vcmask 7168
          %323 = vst.msk [vmem:[#allocation2] sm:$0xff] %vm322, -1e+30
          %324 = vst.msk [vmem:[#allocation2 + $0x8] sm:$0xff] %vm322, -1e+30
          %325 = vst.msk [vmem:[#allocation2 + $0x10] sm:$0xff] %vm322, -1e+30
          %326 = vst.msk [vmem:[#allocation2 + $0x18] sm:$0xff] %vm322, -1e+30
          %327 = vst.msk [vmem:[#allocation3] sm:$0xff] %vm322, 0.0
          %328 = vst.msk [vmem:[#allocation3 + $0x8] sm:$0xff] %vm322, 0.0
          %329 = vst.msk [vmem:[#allocation3 + $0x10] sm:$0xff] %vm322, 0.0
          %330 = vst.msk [vmem:[#allocation3 + $0x18] sm:$0xff] %vm322, 0.0
          %vm331 = vcmask 64512
          %332 = vst.msk [vmem:[#allocation4] sm:$0xff] %vm331, 0.0
          %333 = vst.msk [vmem:[#allocation4 + $0x8] sm:$0xff] %vm331, 0.0
          %334 = vst.msk [vmem:[#allocation4 + $0x10] sm:$0xff] %vm331, 0.0
          %335 = vst.msk [vmem:[#allocation4 + $0x18] sm:$0xff] %vm331, 0.0
        $region44: #{attention_with_dropout.1} parent=39 // pred_fallthru
          _
        %v336 = vld [vmem:[%s300] sm:$0xf]
        %v337 = vld [vmem:[%s300 + $0x4] sm:$0xf]
        %v338 = vld [vmem:[%s300 + $0x8] sm:$0xf]
        %v339 = vld [vmem:[%s300 + $0xc] sm:$0xf]
        %v340 = vld [vmem:[%s308] sm:$0xf]
        %v341 = vld [vmem:[%s308 + $0x4] sm:$0xf]
        %v342 = vld [vmem:[%s308 + $0x8] sm:$0xf]
        %v343 = vld [vmem:[%s308 + $0xc] sm:$0xf]
        %v344 = vld [vmem:[%s316] sm:$0xf]
        %v345 = vld [vmem:[%s316 + $0x4] sm:$0xf]
        %v346 = vld [vmem:[%s316 + $0x8] sm:$0xf]
        %v347 = vld [vmem:[%s316 + $0xc] sm:$0xf]
        %vm348 = vcmask 64512
        %v350 = vsel %vm348, %v336, 0
        %v353 = vsel %vm348, %v340, 0
        %355 = vmatprep.subr.bf16.mxu0 0
        %356 = vmatpush1.bf16.xpose.msra.mxu0 %v353
        %357 = vmatprep.subr.bf16.mxu0 0
        %358 = vmatpush1.bf16.xpose.msra.mxu0 0
        %359 = vmatprep.subr.bf16.mxu0 0
        %360 = vmatpush1.bf16.xpose.msra.mxu0 0
        %361 = vmatprep.subr.bf16.mxu0 0
        %362 = vmatpush1.bf16.xpose.msra.mxu0 0
        %363 = vmatprep.subr.bf16.mxu0 0
        %364 = vmatpush1.bf16.xpose.msra.mxu0 0
        %365 = vmatprep.subr.bf16.mxu0 0
        %366 = vmatpush1.bf16.xpose.msra.mxu0 0
        %367 = vmatprep.subr.bf16.mxu0 0
        %368 = vmatpush1.bf16.xpose.msra.mxu0 0
        %369 = vmatprep.subr.bf16.mxu0 0
        %370 = vmatpush1.bf16.xpose.msra.mxu0 0
        %371 = vmatprep.subr.bf16.mxu0 0
        %372 = vmatpush1.bf16.xpose.msra.mxu0 0
        %373 = vmatprep.subr.bf16.mxu0 0
        %374 = vmatpush1.bf16.xpose.msra.mxu0 0
        %375 = vmatprep.subr.bf16.mxu0 0
        %376 = vmatpush1.bf16.xpose.msra.mxu0 0
        %377 = vmatprep.subr.bf16.mxu0 0
        %378 = vmatpush1.bf16.xpose.msra.mxu0 0
        %379 = vmatprep.subr.bf16.mxu0 0
        %380 = vmatpush1.bf16.xpose.msra.mxu0 0
        %381 = vmatprep.subr.bf16.mxu0 0
        %382 = vmatpush1.bf16.xpose.msra.mxu0 0
        %383 = vmatprep.subr.bf16.mxu0 0
        %384 = vmatpush1.bf16.xpose.msra.mxu0 0
        %385 = vmatprep.subr.bf16.mxu0 0
        %386 = vmatpush1.bf16.xpose.msra.mxu0 0
        %387 = vmatprep.mubr.bf16.mxu0 0
        %388 = vmatmul.mubr.bf16.gmra.mrb[0].mxu0 %v350
        %v389 = vpop.f32.mrb[0].mxu0
        %v390 = vadd.f32 0.0, %v389
        %v391 = vpop.f32.mrb[0].mxu0
        %v392 = vpop.f32.mrb[0].mxu0
        %v393 = vpop.f32.mrb[0].mxu0
        %394 = vdwg.mxu0
        %v396 = vsel %vm348, %v337, 0
        %v399 = vsel %vm348, %v341, 0
        %401 = vmatprep.subr.bf16.mxu0 0
        %402 = vmatpush1.bf16.xpose.msra.mxu0 %v399
        %403 = vmatprep.subr.bf16.mxu0 0
        %404 = vmatpush1.bf16.xpose.msra.mxu0 0
        %405 = vmatprep.subr.bf16.mxu0 0
        %406 = vmatpush1.bf16.xpose.msra.mxu0 0
        %407 = vmatprep.subr.bf16.mxu0 0
        %408 = vmatpush1.bf16.xpose.msra.mxu0 0
        %409 = vmatprep.subr.bf16.mxu0 0
        %410 = vmatpush1.bf16.xpose.msra.mxu0 0
        %411 = vmatprep.subr.bf16.mxu0 0
        %412 = vmatpush1.bf16.xpose.msra.mxu0 0
        %413 = vmatprep.subr.bf16.mxu0 0
        %414 = vmatpush1.bf16.xpose.msra.mxu0 0
        %415 = vmatprep.subr.bf16.mxu0 0
        %416 = vmatpush1.bf16.xpose.msra.mxu0 0
        %417 = vmatprep.subr.bf16.mxu0 0
        %418 = vmatpush1.bf16.xpose.msra.mxu0 0
        %419 = vmatprep.subr.bf16.mxu0 0
        %420 = vmatpush1.bf16.xpose.msra.mxu0 0
        %421 = vmatprep.subr.bf16.mxu0 0
        %422 = vmatpush1.bf16.xpose.msra.mxu0 0
        %423 = vmatprep.subr.bf16.mxu0 0
        %424 = vmatpush1.bf16.xpose.msra.mxu0 0
        %425 = vmatprep.subr.bf16.mxu0 0
        %426 = vmatpush1.bf16.xpose.msra.mxu0 0
        %427 = vmatprep.subr.bf16.mxu0 0
        %428 = vmatpush1.bf16.xpose.msra.mxu0 0
        %429 = vmatprep.subr.bf16.mxu0 0
        %430 = vmatpush1.bf16.xpose.msra.mxu0 0
        %431 = vmatprep.subr.bf16.mxu0 0
        %432 = vmatpush1.bf16.xpose.msra.mxu0 0
        %433 = vmatprep.mubr.bf16.mxu0 0
        %434 = vmatmul.mubr.bf16.gmra.mrb[0].mxu0 %v396
        %v435 = vpop.f32.mrb[0].mxu0
        %v436 = vadd.f32 0.0, %v435
        %v437 = vpop.f32.mrb[0].mxu0
        %v438 = vpop.f32.mrb[0].mxu0
        %v439 = vpop.f32.mrb[0].mxu0
        %440 = vdwg.mxu0
        %v442 = vsel %vm348, %v338, 0
        %v445 = vsel %vm348, %v342, 0
        %447 = vmatprep.subr.bf16.mxu0 0
        %448 = vmatpush1.bf16.xpose.msra.mxu0 %v445
        %449 = vmatprep.subr.bf16.mxu0 0
        %450 = vmatpush1.bf16.xpose.msra.mxu0 0
        %451 = vmatprep.subr.bf16.mxu0 0
        %452 = vmatpush1.bf16.xpose.msra.mxu0 0
        %453 = vmatprep.subr.bf16.mxu0 0
        %454 = vmatpush1.bf16.xpose.msra.mxu0 0
        %455 = vmatprep.subr.bf16.mxu0 0
        %456 = vmatpush1.bf16.xpose.msra.mxu0 0
        %457 = vmatprep.subr.bf16.mxu0 0
        %458 = vmatpush1.bf16.xpose.msra.mxu0 0
        %459 = vmatprep.subr.bf16.mxu0 0
        %460 = vmatpush1.bf16.xpose.msra.mxu0 0
        %461 = vmatprep.subr.bf16.mxu0 0
        %462 = vmatpush1.bf16.xpose.msra.mxu0 0
        %463 = vmatprep.subr.bf16.mxu0 0
        %464 = vmatpush1.bf16.xpose.msra.mxu0 0
        %465 = vmatprep.subr.bf16.mxu0 0
        %466 = vmatpush1.bf16.xpose.msra.mxu0 0
        %467 = vmatprep.subr.bf16.mxu0 0
        %468 = vmatpush1.bf16.xpose.msra.mxu0 0
        %469 = vmatprep.subr.bf16.mxu0 0
        %470 = vmatpush1.bf16.xpose.msra.mxu0 0
        %471 = vmatprep.subr.bf16.mxu0 0
        %472 = vmatpush1.bf16.xpose.msra.mxu0 0
        %473 = vmatprep.subr.bf16.mxu0 0
        %474 = vmatpush1.bf16.xpose.msra.mxu0 0
        %475 = vmatprep.subr.bf16.mxu0 0
        %476 = vmatpush1.bf16.xpose.msra.mxu0 0
        %477 = vmatprep.subr.bf16.mxu0 0
        %478 = vmatpush1.bf16.xpose.msra.mxu0 0
        %479 = vmatprep.mubr.bf16.mxu0 0
        %480 = vmatmul.mubr.bf16.gmra.mrb[0].mxu0 %v442
        %v481 = vpop.f32.mrb[0].mxu0
        %v482 = vadd.f32 0.0, %v481
        %v483 = vpop.f32.mrb[0].mxu0
        %v484 = vpop.f32.mrb[0].mxu0
        %v485 = vpop.f32.mrb[0].mxu0
        %486 = vdwg.mxu0
        %v488 = vsel %vm348, %v339, 0
        %v491 = vsel %vm348, %v343, 0
        %493 = vmatprep.subr.bf16.mxu0 0
        %494 = vmatpush1.bf16.xpose.msra.mxu0 %v491
        %495 = vmatprep.subr.bf16.mxu0 0
        %496 = vmatpush1.bf16.xpose.msra.mxu0 0
        %497 = vmatprep.subr.bf16.mxu0 0
        %498 = vmatpush1.bf16.xpose.msra.mxu0 0
        %499 = vmatprep.subr.bf16.mxu0 0
        %500 = vmatpush1.bf16.xpose.msra.mxu0 0
        %501 = vmatprep.subr.bf16.mxu0 0
        %502 = vmatpush1.bf16.xpose.msra.mxu0 0
        %503 = vmatprep.subr.bf16.mxu0 0
        %504 = vmatpush1.bf16.xpose.msra.mxu0 0
        %505 = vmatprep.subr.bf16.mxu0 0
        %506 = vmatpush1.bf16.xpose.msra.mxu0 0
        %507 = vmatprep.subr.bf16.mxu0 0
        %508 = vmatpush1.bf16.xpose.msra.mxu0 0
        %509 = vmatprep.subr.bf16.mxu0 0
        %510 = vmatpush1.bf16.xpose.msra.mxu0 0
        %511 = vmatprep.subr.bf16.mxu0 0
        %512 = vmatpush1.bf16.xpose.msra.mxu0 0
        %513 = vmatprep.subr.bf16.mxu0 0
        %514 = vmatpush1.bf16.xpose.msra.mxu0 0
        %515 = vmatprep.subr.bf16.mxu0 0
        %516 = vmatpush1.bf16.xpose.msra.mxu0 0
        %517 = vmatprep.subr.bf16.mxu0 0
        %518 = vmatpush1.bf16.xpose.msra.mxu0 0
        %519 = vmatprep.subr.bf16.mxu0 0
        %520 = vmatpush1.bf16.xpose.msra.mxu0 0
        %521 = vmatprep.subr.bf16.mxu0 0
        %522 = vmatpush1.bf16.xpose.msra.mxu0 0
        %523 = vmatprep.subr.bf16.mxu0 0
        %524 = vmatpush1.bf16.xpose.msra.mxu0 0
        %525 = vmatprep.mubr.bf16.mxu0 0
        %526 = vmatmul.mubr.bf16.gmra.mrb[0].mxu0 %v488
        %v527 = vpop.f32.mrb[0].mxu0
        %v528 = vadd.f32 0.0, %v527
        %v529 = vpop.f32.mrb[0].mxu0
        %v530 = vpop.f32.mrb[0].mxu0
        %v531 = vpop.f32.mrb[0].mxu0
        %532 = vdwg.mxu0
        %v533 = vld [vmem:[#allocation2] sm:$0xff]
        %v534 = vld [vmem:[#allocation2 + $0x8] sm:$0xff]
        %v535 = vld [vmem:[#allocation2 + $0x10] sm:$0xff]
        %v536 = vld [vmem:[#allocation2 + $0x18] sm:$0xff]
        %v537 = vsel %vm348, %v390, -inf
        %538 = vmax.xlane.f32.xlu0 %v537
        %v539 = vpop.xlane.xlu0 %538
        %v540 = vsel %vm348, %v436, -inf
        %541 = vmax.xlane.f32.xlu0 %v540
        %v542 = vpop.xlane.xlu0 %541
        %v543 = vsel %vm348, %v482, -inf
        %544 = vmax.xlane.f32.xlu0 %v543
        %v545 = vpop.xlane.xlu0 %544
        %v546 = vsel %vm348, %v528, -inf
        %547 = vmax.xlane.f32.xlu0 %v546
        %v548 = vpop.xlane.xlu0 %547
        %v549 = vmax.f32 %v533, %v539
        %v550 = vmax.f32 %v534, %v542
        %v551 = vmax.f32 %v535, %v545
        %v552 = vmax.f32 %v536, %v548
        %v553 = vsub.f32 %v533, %v549
        %v554 = vsub.f32 %v534, %v550
        %v555 = vsub.f32 %v535, %v551
        %v556 = vsub.f32 %v536, %v552
        %v557 = vpow.pop %v553
        %v558 = vpow.pop %v554
        %v559 = vpow.pop %v555
        %v560 = vpow.pop %v556
        %562 = vset.pattern.permute.xlu0 0
        %563 = vperm.xlu0 %562, %v549
        %v564 = vpop.permute.xlu0 %563
        %567 = vset.pattern.permute.xlu0 0
        %568 = vperm.xlu0 %567, %v550
        %v569 = vpop.permute.xlu0 %568
        %572 = vset.pattern.permute.xlu0 0
        %573 = vperm.xlu0 %572, %v551
        %v574 = vpop.permute.xlu0 %573
        %577 = vset.pattern.permute.xlu0 0
        %578 = vperm.xlu0 %577, %v552
        %v579 = vpop.permute.xlu0 %578
        %v581 = vsub.f32 %v390, %v564
        %v582 = vsub.f32 %v436, %v569
        %v583 = vsub.f32 %v482, %v574
        %v584 = vsub.f32 %v528, %v579
        %v585 = vpow.pop %v581
        %v586 = vpow.pop %v582
        %v587 = vpow.pop %v583
        %v588 = vpow.pop %v584
        %v589 = vld [vmem:[#allocation3] sm:$0xff]
        %v590 = vld [vmem:[#allocation3 + $0x8] sm:$0xff]
        %v591 = vld [vmem:[#allocation3 + $0x10] sm:$0xff]
        %v592 = vld [vmem:[#allocation3 + $0x18] sm:$0xff]
        %v593 = vmul.f32 %v557, %v589
        %v594 = vmul.f32 %v558, %v590
        %v595 = vmul.f32 %v559, %v591
        %v596 = vmul.f32 %v560, %v592
        %v597 = vsel %vm348, %v585, 0.0
        %598 = vadd.xlane.f32.xlu0 %v597
        %v599 = vpop.xlane.xlu0 %598
        %v600 = vsel %vm348, %v586, 0.0
        %601 = vadd.xlane.f32.xlu0 %v600
        %v602 = vpop.xlane.xlu0 %601
        %v603 = vsel %vm348, %v587, 0.0
        %604 = vadd.xlane.f32.xlu0 %v603
        %v605 = vpop.xlane.xlu0 %604
        %v606 = vsel %vm348, %v588, 0.0
        %607 = vadd.xlane.f32.xlu0 %v606
        %v608 = vpop.xlane.xlu0 %607
        %v609 = vadd.f32 %v593, %v599
        %v610 = vadd.f32 %v594, %v602
        %v611 = vadd.f32 %v595, %v605
        %v612 = vadd.f32 %v596, %v608
        %vm613 = vcmask 7168
        %614 = vst.msk [vmem:[#allocation3] sm:$0xff] %vm613, %v609
        %615 = vst.msk [vmem:[#allocation3 + $0x8] sm:$0xff] %vm613, %v610
        %616 = vst.msk [vmem:[#allocation3 + $0x10] sm:$0xff] %vm613, %v611
        %617 = vst.msk [vmem:[#allocation3 + $0x18] sm:$0xff] %vm613, %v612
        %v618 = vpack.c.bf16 %v585, %v585
        %v619 = vpack.c.bf16 %v586, %v586
        %v620 = vpack.c.bf16 %v587, %v587
        %v621 = vpack.c.bf16 %v588, %v588
        %v623 = vsel %vm348, %v618, 0
        %vm625 = vcmask 1043456
        %v627 = vsel %vm625, %v344, 0
        %629 = vmatprep.subr.bf16.mxu0 0
        %630 = vmatpush1.bf16.msra.mxu0 %v627
        %631 = vmatprep.subr.bf16.mxu0 0
        %632 = vmatpush1.bf16.msra.mxu0 0
        %633 = vmatprep.subr.bf16.mxu0 0
        %634 = vmatpush1.bf16.msra.mxu0 0
        %635 = vmatprep.subr.bf16.mxu0 0
        %636 = vmatpush1.bf16.msra.mxu0 0
        %637 = vmatprep.subr.bf16.mxu0 0
        %638 = vmatpush1.bf16.msra.mxu0 0
        %639 = vmatprep.subr.bf16.mxu0 0
        %640 = vmatpush1.bf16.msra.mxu0 0
        %641 = vmatprep.subr.bf16.mxu0 0
        %642 = vmatpush1.bf16.msra.mxu0 0
        %643 = vmatprep.subr.bf16.mxu0 0
        %644 = vmatpush1.bf16.msra.mxu0 0
        %645 = vmatprep.subr.bf16.mxu0 0
        %646 = vmatpush1.bf16.msra.mxu0 0
        %647 = vmatprep.subr.bf16.mxu0 0
        %648 = vmatpush1.bf16.msra.mxu0 0
        %649 = vmatprep.subr.bf16.mxu0 0
        %650 = vmatpush1.bf16.msra.mxu0 0
        %651 = vmatprep.subr.bf16.mxu0 0
        %652 = vmatpush1.bf16.msra.mxu0 0
        %653 = vmatprep.subr.bf16.mxu0 0
        %654 = vmatpush1.bf16.msra.mxu0 0
        %655 = vmatprep.subr.bf16.mxu0 0
        %656 = vmatpush1.bf16.msra.mxu0 0
        %657 = vmatprep.subr.bf16.mxu0 0
        %658 = vmatpush1.bf16.msra.mxu0 0
        %659 = vmatprep.subr.bf16.mxu0 0
        %660 = vmatpush1.bf16.msra.mxu0 0
        %661 = vmatprep.mubr.bf16.mxu0 0
        %662 = vmatmul.mubr.bf16.gmra.mrb[0].mxu0 %v623
        %v663 = vpop.f32.mrb[0].mxu0
        %v664 = vadd.f32 0.0, %v663
        %v665 = vpop.f32.mrb[0].mxu0
        %v666 = vpop.f32.mrb[0].mxu0
        %v667 = vpop.f32.mrb[0].mxu0
        %668 = vdwg.mxu0
        %v670 = vsel %vm348, %v619, 0
        %v673 = vsel %vm625, %v345, 0
        %675 = vmatprep.subr.bf16.mxu0 0
        %676 = vmatpush1.bf16.msra.mxu0 %v673
        %677 = vmatprep.subr.bf16.mxu0 0
        %678 = vmatpush1.bf16.msra.mxu0 0
        %679 = vmatprep.subr.bf16.mxu0 0
        %680 = vmatpush1.bf16.msra.mxu0 0
        %681 = vmatprep.subr.bf16.mxu0 0
        %682 = vmatpush1.bf16.msra.mxu0 0
        %683 = vmatprep.subr.bf16.mxu0 0
        %684 = vmatpush1.bf16.msra.mxu0 0
        %685 = vmatprep.subr.bf16.mxu0 0
        %686 = vmatpush1.bf16.msra.mxu0 0
        %687 = vmatprep.subr.bf16.mxu0 0
        %688 = vmatpush1.bf16.msra.mxu0 0
        %689 = vmatprep.subr.bf16.mxu0 0
        %690 = vmatpush1.bf16.msra.mxu0 0
        %691 = vmatprep.subr.bf16.mxu0 0
        %692 = vmatpush1.bf16.msra.mxu0 0
        %693 = vmatprep.subr.bf16.mxu0 0
        %694 = vmatpush1.bf16.msra.mxu0 0
        %695 = vmatprep.subr.bf16.mxu0 0
        %696 = vmatpush1.bf16.msra.mxu0 0
        %697 = vmatprep.subr.bf16.mxu0 0
        %698 = vmatpush1.bf16.msra.mxu0 0
        %699 = vmatprep.subr.bf16.mxu0 0
        %700 = vmatpush1.bf16.msra.mxu0 0
        %701 = vmatprep.subr.bf16.mxu0 0
        %702 = vmatpush1.bf16.msra.mxu0 0
        %703 = vmatprep.subr.bf16.mxu0 0
        %704 = vmatpush1.bf16.msra.mxu0 0
        %705 = vmatprep.subr.bf16.mxu0 0
        %706 = vmatpush1.bf16.msra.mxu0 0
        %707 = vmatprep.mubr.bf16.mxu0 0
        %708 = vmatmul.mubr.bf16.gmra.mrb[0].mxu0 %v670
        %v709 = vpop.f32.mrb[0].mxu0
        %v710 = vadd.f32 0.0, %v709
        %v711 = vpop.f32.mrb[0].mxu0
        %v712 = vpop.f32.mrb[0].mxu0
        %v713 = vpop.f32.mrb[0].mxu0
        %714 = vdwg.mxu0
        %v716 = vsel %vm348, %v620, 0
        %v719 = vsel %vm625, %v346, 0
        %721 = vmatprep.subr.bf16.mxu0 0
        %722 = vmatpush1.bf16.msra.mxu0 %v719
        %723 = vmatprep.subr.bf16.mxu0 0
        %724 = vmatpush1.bf16.msra.mxu0 0
        %725 = vmatprep.subr.bf16.mxu0 0
        %726 = vmatpush1.bf16.msra.mxu0 0
        %727 = vmatprep.subr.bf16.mxu0 0
        %728 = vmatpush1.bf16.msra.mxu0 0
        %729 = vmatprep.subr.bf16.mxu0 0
        %730 = vmatpush1.bf16.msra.mxu0 0
        %731 = vmatprep.subr.bf16.mxu0 0
        %732 = vmatpush1.bf16.msra.mxu0 0
        %733 = vmatprep.subr.bf16.mxu0 0
        %734 = vmatpush1.bf16.msra.mxu0 0
        %735 = vmatprep.subr.bf16.mxu0 0
        %736 = vmatpush1.bf16.msra.mxu0 0
        %737 = vmatprep.subr.bf16.mxu0 0
        %738 = vmatpush1.bf16.msra.mxu0 0
        %739 = vmatprep.subr.bf16.mxu0 0
        %740 = vmatpush1.bf16.msra.mxu0 0
        %741 = vmatprep.subr.bf16.mxu0 0
        %742 = vmatpush1.bf16.msra.mxu0 0
        %743 = vmatprep.subr.bf16.mxu0 0
        %744 = vmatpush1.bf16.msra.mxu0 0
        %745 = vmatprep.subr.bf16.mxu0 0
        %746 = vmatpush1.bf16.msra.mxu0 0
        %747 = vmatprep.subr.bf16.mxu0 0
        %748 = vmatpush1.bf16.msra.mxu0 0
        %749 = vmatprep.subr.bf16.mxu0 0
        %750 = vmatpush1.bf16.msra.mxu0 0
        %751 = vmatprep.subr.bf16.mxu0 0
        %752 = vmatpush1.bf16.msra.mxu0 0
        %753 = vmatprep.mubr.bf16.mxu0 0
        %754 = vmatmul.mubr.bf16.gmra.mrb[0].mxu0 %v716
        %v755 = vpop.f32.mrb[0].mxu0
        %v756 = vadd.f32 0.0, %v755
        %v757 = vpop.f32.mrb[0].mxu0
        %v758 = vpop.f32.mrb[0].mxu0
        %v759 = vpop.f32.mrb[0].mxu0
        %760 = vdwg.mxu0
        %v762 = vsel %vm348, %v621, 0
        %v765 = vsel %vm625, %v347, 0
        %767 = vmatprep.subr.bf16.mxu0 0
        %768 = vmatpush1.bf16.msra.mxu0 %v765
        %769 = vmatprep.subr.bf16.mxu0 0
        %770 = vmatpush1.bf16.msra.mxu0 0
        %771 = vmatprep.subr.bf16.mxu0 0
        %772 = vmatpush1.bf16.msra.mxu0 0
        %773 = vmatprep.subr.bf16.mxu0 0
        %774 = vmatpush1.bf16.msra.mxu0 0
        %775 = vmatprep.subr.bf16.mxu0 0
        %776 = vmatpush1.bf16.msra.mxu0 0
        %777 = vmatprep.subr.bf16.mxu0 0
        %778 = vmatpush1.bf16.msra.mxu0 0
        %779 = vmatprep.subr.bf16.mxu0 0
        %780 = vmatpush1.bf16.msra.mxu0 0
        %781 = vmatprep.subr.bf16.mxu0 0
        %782 = vmatpush1.bf16.msra.mxu0 0
        %783 = vmatprep.subr.bf16.mxu0 0
        %784 = vmatpush1.bf16.msra.mxu0 0
        %785 = vmatprep.subr.bf16.mxu0 0
        %786 = vmatpush1.bf16.msra.mxu0 0
        %787 = vmatprep.subr.bf16.mxu0 0
        %788 = vmatpush1.bf16.msra.mxu0 0
        %789 = vmatprep.subr.bf16.mxu0 0
        %790 = vmatpush1.bf16.msra.mxu0 0
        %791 = vmatprep.subr.bf16.mxu0 0
        %792 = vmatpush1.bf16.msra.mxu0 0
        %793 = vmatprep.subr.bf16.mxu0 0
        %794 = vmatpush1.bf16.msra.mxu0 0
        %795 = vmatprep.subr.bf16.mxu0 0
        %796 = vmatpush1.bf16.msra.mxu0 0
        %797 = vmatprep.subr.bf16.mxu0 0
        %798 = vmatpush1.bf16.msra.mxu0 0
        %799 = vmatprep.mubr.bf16.mxu0 0
        %800 = vmatmul.mubr.bf16.gmra.mrb[0].mxu0 %v762
        %v801 = vpop.f32.mrb[0].mxu0
        %v802 = vadd.f32 0.0, %v801
        %v803 = vpop.f32.mrb[0].mxu0
        %v804 = vpop.f32.mrb[0].mxu0
        %v805 = vpop.f32.mrb[0].mxu0
        %806 = vdwg.mxu0
        %v807 = vld [vmem:[#allocation4] sm:$0xff]
        %v808 = vld [vmem:[#allocation4 + $0x8] sm:$0xff]
        %v809 = vld [vmem:[#allocation4 + $0x10] sm:$0xff]
        %v810 = vld [vmem:[#allocation4 + $0x18] sm:$0xff]
        %812 = vset.pattern.permute.xlu0 0
        %813 = vperm.xlu0 %812, %v557
        %v814 = vpop.permute.xlu0 %813
        %817 = vset.pattern.permute.xlu0 0
        %818 = vperm.xlu0 %817, %v558
        %v819 = vpop.permute.xlu0 %818
        %822 = vset.pattern.permute.xlu0 0
        %823 = vperm.xlu0 %822, %v559
        %v824 = vpop.permute.xlu0 %823
        %827 = vset.pattern.permute.xlu0 0
        %828 = vperm.xlu0 %827, %v560
        %v829 = vpop.permute.xlu0 %828
        %v831 = vmul.f32 %v814, %v807
        %v832 = vmul.f32 %v819, %v808
        %v833 = vmul.f32 %v824, %v809
        %v834 = vmul.f32 %v829, %v810
        %v835 = vadd.f32 %v831, %v664
        %v836 = vadd.f32 %v832, %v710
        %v837 = vadd.f32 %v833, %v756
        %v838 = vadd.f32 %v834, %v802
        %839 = vst.msk [vmem:[#allocation4] sm:$0xff] %vm348, %v835
        %840 = vst.msk [vmem:[#allocation4 + $0x8] sm:$0xff] %vm348, %v836
        %841 = vst.msk [vmem:[#allocation4 + $0x10] sm:$0xff] %vm348, %v837
        %842 = vst.msk [vmem:[#allocation4 + $0x18] sm:$0xff] %vm348, %v838
        %843 = vst.msk [vmem:[#allocation2] sm:$0xff] %vm613, %v549
        %844 = vst.msk [vmem:[#allocation2 + $0x8] sm:$0xff] %vm613, %v550
        %845 = vst.msk [vmem:[#allocation2 + $0x10] sm:$0xff] %vm613, %v551
        %846 = vst.msk [vmem:[#allocation2 + $0x18] sm:$0xff] %vm613, %v552
        // Predicated region
        $region45: #{attention_with_dropout.1} parent=39 // pred_check
          %p847 = pneg %p318
        $region46: #{attention_with_dropout.1} parent=39 // pred_check_branch
          %849 = sbr.rel (%p847) target = $region48
        $region47: #{attention_with_dropout.1} parent=39 // pred_region
          %v850 = vld [vmem:[#allocation3] sm:$0xff]
          %v851 = vld [vmem:[#allocation3 + $0x8] sm:$0xff]
          %v852 = vld [vmem:[#allocation3 + $0x10] sm:$0xff]
          %v853 = vld [vmem:[#allocation3 + $0x18] sm:$0xff]
          %v854 = vrcp.pop %v850
          %v855 = vrcp.pop %v851
          %v856 = vrcp.pop %v852
          %v857 = vrcp.pop %v853
          %v858 = vld [vmem:[#allocation4] sm:$0xff]
          %v859 = vld [vmem:[#allocation4 + $0x8] sm:$0xff]
          %v860 = vld [vmem:[#allocation4 + $0x10] sm:$0xff]
          %v861 = vld [vmem:[#allocation4 + $0x18] sm:$0xff]
          %863 = vset.pattern.permute.xlu0 0
          %864 = vperm.xlu0 %863, %v854
          %v865 = vpop.permute.xlu0 %864
          %868 = vset.pattern.permute.xlu0 0
          %869 = vperm.xlu0 %868, %v855
          %v870 = vpop.permute.xlu0 %869
          %873 = vset.pattern.permute.xlu0 0
          %874 = vperm.xlu0 %873, %v856
          %v875 = vpop.permute.xlu0 %874
          %878 = vset.pattern.permute.xlu0 0
          %879 = vperm.xlu0 %878, %v857
          %v880 = vpop.permute.xlu0 %879
          %v882 = vmul.f32 %v858, %v865
          %v883 = vmul.f32 %v859, %v870
          %v884 = vmul.f32 %v860, %v875
          %v885 = vmul.f32 %v861, %v880
          %v886 = vpack.c.bf16 %v882, %v882
          %v887 = vpack.c.bf16 %v883, %v883
          %v888 = vpack.c.bf16 %v884, %v884
          %v889 = vpack.c.bf16 %v885, %v885
          %v890 = vld [vmem:[%s3] sm:$0xf]
          %s891 = scalar_lea.vmem %s3, 4
          %v892 = vld [vmem:[%s891] sm:$0xf]
          %v894 = vsel %vm348, %v887, 0
          %v897 = vsel %vm625, %v892, 0
          %899 = vmatprep.subr.bf16.mxu0 0
          %900 = vmatpush1.bf16.msra.mxu0 %v897
          %901 = vmatprep.subr.bf16.mxu0 0
          %902 = vmatpush1.bf16.msra.mxu0 0
          %903 = vmatprep.subr.bf16.mxu0 0
          %904 = vmatpush1.bf16.msra.mxu0 0
          %905 = vmatprep.subr.bf16.mxu0 0
          %906 = vmatpush1.bf16.msra.mxu0 0
          %907 = vmatprep.subr.bf16.mxu0 0
          %908 = vmatpush1.bf16.msra.mxu0 0
          %909 = vmatprep.subr.bf16.mxu0 0
          %910 = vmatpush1.bf16.msra.mxu0 0
          %911 = vmatprep.subr.bf16.mxu0 0
          %912 = vmatpush1.bf16.msra.mxu0 0
          %913 = vmatprep.subr.bf16.mxu0 0
          %914 = vmatpush1.bf16.msra.mxu0 0
          %915 = vmatprep.subr.bf16.mxu0 0
          %916 = vmatpush1.bf16.msra.mxu0 0
          %917 = vmatprep.subr.bf16.mxu0 0
          %918 = vmatpush1.bf16.msra.mxu0 0
          %919 = vmatprep.subr.bf16.mxu0 0
          %920 = vmatpush1.bf16.msra.mxu0 0
          %921 = vmatprep.subr.bf16.mxu0 0
          %922 = vmatpush1.bf16.msra.mxu0 0
          %923 = vmatprep.subr.bf16.mxu0 0
          %924 = vmatpush1.bf16.msra.mxu0 0
          %925 = vmatprep.subr.bf16.mxu0 0
          %926 = vmatpush1.bf16.msra.mxu0 0
          %927 = vmatprep.subr.bf16.mxu0 0
          %928 = vmatpush1.bf16.msra.mxu0 0
          %929 = vmatprep.subr.bf16.mxu0 0
          %930 = vmatpush1.bf16.msra.mxu0 0
          %931 = vmatprep.mubr.bf16.mxu0 0
          %932 = vmatmul.mubr.bf16.gmra.mrb[0].mxu0 %v894
          %v933 = vpop.f32.mrb[0].mxu0
          %v934 = vadd.f32 0.0, %v933
          %v935 = vpop.f32.mrb[0].mxu0
          %v936 = vpop.f32.mrb[0].mxu0
          %v937 = vpop.f32.mrb[0].mxu0
          %938 = vdwg.mxu0
          %v940 = vsel %vm348, %v886, 0
          %v943 = vsel %vm625, %v890, 0
          %945 = vmatprep.subr.bf16.mxu0 0
          %946 = vmatpush1.bf16.msra.mxu0 %v943
          %947 = vmatprep.subr.bf16.mxu0 0
          %948 = vmatpush1.bf16.msra.mxu0 0
          %949 = vmatprep.subr.bf16.mxu0 0
          %950 = vmatpush1.bf16.msra.mxu0 0
          %951 = vmatprep.subr.bf16.mxu0 0
          %952 = vmatpush1.bf16.msra.mxu0 0
          %953 = vmatprep.subr.bf16.mxu0 0
          %954 = vmatpush1.bf16.msra.mxu0 0
          %955 = vmatprep.subr.bf16.mxu0 0
          %956 = vmatpush1.bf16.msra.mxu0 0
          %957 = vmatprep.subr.bf16.mxu0 0
          %958 = vmatpush1.bf16.msra.mxu0 0
          %959 = vmatprep.subr.bf16.mxu0 0
          %960 = vmatpush1.bf16.msra.mxu0 0
          %961 = vmatprep.subr.bf16.mxu0 0
          %962 = vmatpush1.bf16.msra.mxu0 0
          %963 = vmatprep.subr.bf16.mxu0 0
          %964 = vmatpush1.bf16.msra.mxu0 0
          %965 = vmatprep.subr.bf16.mxu0 0
          %966 = vmatpush1.bf16.msra.mxu0 0
          %967 = vmatprep.subr.bf16.mxu0 0
          %968 = vmatpush1.bf16.msra.mxu0 0
          %969 = vmatprep.subr.bf16.mxu0 0
          %970 = vmatpush1.bf16.msra.mxu0 0
          %971 = vmatprep.subr.bf16.mxu0 0
          %972 = vmatpush1.bf16.msra.mxu0 0
          %973 = vmatprep.subr.bf16.mxu0 0
          %974 = vmatpush1.bf16.msra.mxu0 0
          %975 = vmatprep.subr.bf16.mxu0 0
          %976 = vmatpush1.bf16.msra.mxu0 0
          %977 = vmatprep.mubr.bf16.mxu0 0
          %978 = vmatmul.mubr.bf16.gmra.mrb[0].mxu0 %v940
          %v979 = vpop.f32.mrb[0].mxu0
          %v980 = vadd.f32 %v934, %v979
          %v981 = vpop.f32.mrb[0].mxu0
          %v982 = vpop.f32.mrb[0].mxu0
          %v983 = vpop.f32.mrb[0].mxu0
          %984 = vdwg.mxu0
          %s985 = scalar_lea.vmem %s3, 8
          %v986 = vld [vmem:[%s985] sm:$0xf]
          %v988 = vsel %vm348, %v888, 0
          %v991 = vsel %vm625, %v986, 0
          %993 = vmatprep.subr.bf16.mxu0 0
          %994 = vmatpush1.bf16.msra.mxu0 %v991
          %995 = vmatprep.subr.bf16.mxu0 0
          %996 = vmatpush1.bf16.msra.mxu0 0
          %997 = vmatprep.subr.bf16.mxu0 0
          %998 = vmatpush1.bf16.msra.mxu0 0
          %999 = vmatprep.subr.bf16.mxu0 0
          %1000 = vmatpush1.bf16.msra.mxu0 0
          %1001 = vmatprep.subr.bf16.mxu0 0
          %1002 = vmatpush1.bf16.msra.mxu0 0
          %1003 = vmatprep.subr.bf16.mxu0 0
          %1004 = vmatpush1.bf16.msra.mxu0 0
          %1005 = vmatprep.subr.bf16.mxu0 0
          %1006 = vmatpush1.bf16.msra.mxu0 0
          %1007 = vmatprep.subr.bf16.mxu0 0
          %1008 = vmatpush1.bf16.msra.mxu0 0
          %1009 = vmatprep.subr.bf16.mxu0 0
          %1010 = vmatpush1.bf16.msra.mxu0 0
          %1011 = vmatprep.subr.bf16.mxu0 0
          %1012 = vmatpush1.bf16.msra.mxu0 0
          %1013 = vmatprep.subr.bf16.mxu0 0
          %1014 = vmatpush1.bf16.msra.mxu0 0
          %1015 = vmatprep.subr.bf16.mxu0 0
          %1016 = vmatpush1.bf16.msra.mxu0 0
          %1017 = vmatprep.subr.bf16.mxu0 0
          %1018 = vmatpush1.bf16.msra.mxu0 0
          %1019 = vmatprep.subr.bf16.mxu0 0
          %1020 = vmatpush1.bf16.msra.mxu0 0
          %1021 = vmatprep.subr.bf16.mxu0 0
          %1022 = vmatpush1.bf16.msra.mxu0 0
          %1023 = vmatprep.subr.bf16.mxu0 0
          %1024 = vmatpush1.bf16.msra.mxu0 0
          %1025 = vmatprep.mubr.bf16.mxu0 0
          %1026 = vmatmul.mubr.bf16.gmra.mrb[0].mxu0 %v988
          %v1027 = vpop.f32.mrb[0].mxu0
          %v1028 = vadd.f32 0.0, %v1027
          %v1029 = vpop.f32.mrb[0].mxu0
          %v1030 = vpop.f32.mrb[0].mxu0
          %v1031 = vpop.f32.mrb[0].mxu0
          %1032 = vdwg.mxu0
          %v1033 = vadd.f32 %v980, %v1028
          %s1034 = scalar_lea.vmem %s3, 12
          %v1035 = vld [vmem:[%s1034] sm:$0xf]
          %v1037 = vsel %vm348, %v889, 0
          %v1040 = vsel %vm625, %v1035, 0
          %1042 = vmatprep.subr.bf16.mxu0 0
          %1043 = vmatpush1.bf16.msra.mxu0 %v1040
          %1044 = vmatprep.subr.bf16.mxu0 0
          %1045 = vmatpush1.bf16.msra.mxu0 0
          %1046 = vmatprep.subr.bf16.mxu0 0
          %1047 = vmatpush1.bf16.msra.mxu0 0
          %1048 = vmatprep.subr.bf16.mxu0 0
          %1049 = vmatpush1.bf16.msra.mxu0 0
          %1050 = vmatprep.subr.bf16.mxu0 0
          %1051 = vmatpush1.bf16.msra.mxu0 0
          %1052 = vmatprep.subr.bf16.mxu0 0
          %1053 = vmatpush1.bf16.msra.mxu0 0
          %1054 = vmatprep.subr.bf16.mxu0 0
          %1055 = vmatpush1.bf16.msra.mxu0 0
          %1056 = vmatprep.subr.bf16.mxu0 0
          %1057 = vmatpush1.bf16.msra.mxu0 0
          %1058 = vmatprep.subr.bf16.mxu0 0
          %1059 = vmatpush1.bf16.msra.mxu0 0
          %1060 = vmatprep.subr.bf16.mxu0 0
          %1061 = vmatpush1.bf16.msra.mxu0 0
          %1062 = vmatprep.subr.bf16.mxu0 0
          %1063 = vmatpush1.bf16.msra.mxu0 0
          %1064 = vmatprep.subr.bf16.mxu0 0
          %1065 = vmatpush1.bf16.msra.mxu0 0
          %1066 = vmatprep.subr.bf16.mxu0 0
          %1067 = vmatpush1.bf16.msra.mxu0 0
          %1068 = vmatprep.subr.bf16.mxu0 0
          %1069 = vmatpush1.bf16.msra.mxu0 0
          %1070 = vmatprep.subr.bf16.mxu0 0
          %1071 = vmatpush1.bf16.msra.mxu0 0
          %1072 = vmatprep.subr.bf16.mxu0 0
          %1073 = vmatpush1.bf16.msra.mxu0 0
          %1074 = vmatprep.mubr.bf16.mxu0 0
          %1075 = vmatmul.mubr.bf16.gmra.mrb[0].mxu0 %v1037
          %v1076 = vpop.f32.mrb[0].mxu0
          %v1077 = vadd.f32 0.0, %v1076
          %v1078 = vpop.f32.mrb[0].mxu0
          %v1079 = vpop.f32.mrb[0].mxu0
          %v1080 = vpop.f32.mrb[0].mxu0
          %1081 = vdwg.mxu0
          %v1082 = vadd.f32 %v1033, %v1077
          %v1083 = vld [vmem:[%s4] sm:$0x1]
          %v1085 = vlaneseq
          %v1086 = vshrl.u32 %v1085, 7
          %v1087 = vsub.s32 0, %v1086
          %v1088 = vrot.slane %v1083, %v1087
          %v1090 = vadd.f32 %v1082, %v1088
          %vm1091 = vcmask 261120
          %1092 = vst.msk [vmem:[%s292] sm:$0xff] %vm1091, %v1090
        $region48: #{attention_with_dropout.1} parent=39 // pred_fallthru
          _
        %s1093 = sand.u32 %s174, 1
        %s1094 = scalar_lea.sflag [#allocation6], %s1093
        %s1095 = sand.u32 %s174, 1
        %s1096 = smul.addr %s1095, 8
        %s1097 = scalar_lea.vmem [#allocation5], %s1096
        // Predicated region
        $region49: #{attention_with_dropout.1} parent=39 // pred_check
          %p1098 = pneg %p184
        $region50: #{attention_with_dropout.1} parent=39 // pred_check_branch
          %1100 = sbr.rel (%p1098) target = $region52
        $region51: #{attention_with_dropout.1} parent=39 // pred_region
          %s1102 = ssub.s32 128, 128
          %1103 = vsyncadd %s1094, %s1102
          %s1104 = sadd.s32 %s25, %s24
          %s1105 = smul.addr %s1104, 128
          %s1106 = scalar_lea.hbm %s5, %s1105
          %s1108 = sshll.u32 %s1097, 4
          %s1109 = int_to_ptr.vmem [resolvable:$true] %s1108
          %1111 = dma.vmem_to_hbm [thread:$0]  %s1109, 128, %s1106, %s1094
        $region52: #{attention_with_dropout.1} parent=39 // pred_fallthru
          _
      $region40: #{attention_with_dropout.1} parent=5 // pred_fallthru
        _
      %p1112 = scmp.le.s32.totalorder 2, %s14
      // Predicated region
      $region53: #{attention_with_dropout.1} parent=5 // pred_check
        %p1113 = pneg %p1112
      $region54: #{attention_with_dropout.1} parent=5 // pred_check_branch
        %1115 = sbr.rel (%p1113) target = $region56
      $region55: #{attention_with_dropout.1} parent=5 // pred_region
        %s1116 = ssub.s32 %s14, 2
        // Predicated region
        $region57: #{attention_with_dropout.1} parent=55 // pred_check
          %p1117 = pneg %p190
        $region58: #{attention_with_dropout.1} parent=55 // pred_check_branch
          %1119 = sbr.rel (%p1117) target = $region60
        $region59: #{attention_with_dropout.1} parent=55 // pred_region
          %s1120 = sand.u32 %s175, 1
          %s1121 = scalar_lea.sflag [#allocation6], %s1120
          %s1122 = sand.u32 %s175, 1
          %s1123 = smul.addr %s1122, 8
          %s1124 = scalar_lea.vmem [#allocation5], %s1123
          %1125 = dma.done %s1121, 128
        $region60: #{attention_with_dropout.1} parent=55 // pred_fallthru
          _
      $region56: #{attention_with_dropout.1} parent=5 // pred_fallthru
        _
    $region6: #{attention_with_dropout.1} parent=1 // loop_footer
      %s18 = sadd.s32 1, %s14
    $region7: #{attention_with_dropout.1} parent=1 // loop_footer_branch
      %13 = sbr.rel target = $region3
    $region8: #{attention_with_dropout.1} parent=1 // loop_exit
      _
    %1126 = vsyncpa [#allocation6], 1
    %s1127 = scalar_lea.sflag [#allocation6], 1
    %1128 = vsyncpa %s1127, 1

</llo_original>
